<compile_context>
chip_gen: v6e
topology: v6e:2x2x1
jax: 0.10.0
libtpu: 0.0.40
codegen_flags: <defaults>
</compile_context>

<pallas_src>
import jax
import jax.numpy as jnp
from jax.experimental import pallas as pl
from jax.experimental.pallas import tpu as pltpu

_EPS = 1e-5
_VMEM_LIMIT = 32 * 1024 * 1024  # safe on v5e/v6e (128 MiB phys) and v7x (64 MiB phys)


# --------------------------------------------------------------------------- #
# Pass 1: per-channel sum / sum-of-squares, accumulated over L tiles.
# --------------------------------------------------------------------------- #
def _stats_kernel(x_ref, sum_ref, sumsq_ref):
    # x_ref block: (C, TL); sum/sumsq blocks: (C, 1), resident across the L axis.
    @pl.when(pl.program_id(1) == 0)
    def _init():
        sum_ref[...] = jnp.zeros_like(sum_ref)
        sumsq_ref[...] = jnp.zeros_like(sumsq_ref)

    x = x_ref[...].astype(jnp.float32)                        # (C, TL)
    sum_ref[...] += jnp.sum(x, axis=-1, keepdims=True)        # (C, 1)
    sumsq_ref[...] += jnp.sum(x * x, axis=-1, keepdims=True)  # (C, 1)


# --------------------------------------------------------------------------- #
# Pass 2: single fused per-channel FMA sweep: o = x * scale + offset.
# --------------------------------------------------------------------------- #
def _apply_kernel(so_ref, x_ref, o_ref):
    # so_ref block: (2, C, 1) packed [scale; offset]; x/o blocks: (C, TL).
    x = x_ref[...].astype(jnp.float32)
    scale = so_ref[0]    # (C, 1)
    offset = so_ref[1]   # (C, 1)
    o_ref[...] = (x * scale + offset).astype(o_ref.dtype)


def _pick_l_tile(l_padded, c, itemsize, max_tile_bytes=2 << 20, max_tl=2048):
    """Largest multiple of 128 that divides l_padded, capped by a VMEM budget."""
    cap = (max_tile_bytes // max(c * itemsize, 1)) // 128 * 128
    cap = max(128, min(max_tl, cap))
    for cand in range(cap, 127, -128):
        if l_padded % cand == 0:
            return cand
    return 128


def instance_norm_1d_plus(x, alpha, gamma, beta=None):
    """x: (N, C, L); alpha/gamma/beta: (C,). beta=None means bias=False."""
    N, C, L = x.shape
    out_dtype = x.dtype

    # Lane-dense layout: pad L up to a multiple of 128 with zeros (zeros do not
    # perturb sum / sumsq; the mean/var divide uses the true L below).
    # TODO(synk): if the real workload has tiny L (e.g. <=16), relayout so N*C
    # sits on the lane axis instead of paying for 8x padding.
    L_pad = max(128, ((L + 127) // 128) * 128)
    x_p = x if L_pad == L else jnp.pad(x, ((0, 0), (0, 0), (0, L_pad - L)))

    TL = _pick_l_tile(L_pad, C, jnp.dtype(x.dtype).itemsize)
    nL = L_pad // TL

    # ---------------- pass 1: per-(n, c) sum and sumsq over L ---------------- #
    sums, sumsqs = pl.pallas_call(
        _stats_kernel,
        out_shape=(
            jax.ShapeDtypeStruct((N, C, 1), jnp.float32),
            jax.ShapeDtypeStruct((N, C, 1), jnp.float32),
        ),
        grid=(N, nL),
        in_specs=[
            pl.BlockSpec((pl.Squeezed(), C, TL), lambda n, l: (n, 0, l)),
        ],
        out_specs=(
            pl.BlockSpec((pl.Squeezed(), C, 1), lambda n, l: (n, 0, 0)),
            pl.BlockSpec((pl.Squeezed(), C, 1), lambda n, l: (n, 0, 0)),
        ),
        compiler_params=pltpu.CompilerParams(
            dimension_semantics=("parallel", "arbitrary"),
            vmem_limit_bytes=_VMEM_LIMIT,
        ),
    )(x_p)

    # ---------- cheap "plus" stats + fold affine tail, in plain JAX ---------- #
    sums = sums[..., 0]        # (N, C)
    sumsqs = sumsqs[..., 0]    # (N, C)
    alpha32 = alpha.astype(jnp.float32)
    gamma32 = gamma.astype(jnp.float32)
    beta32 = jnp.zeros((C,), jnp.float32) if beta is None else beta.astype(jnp.float32)

    mean = sums / L                                           # per-channel mean
    var = jnp.maximum(sumsqs / L - mean * mean, 0.0)          # biased (InstanceNorm)
    inv = jax.lax.rsqrt(var + _EPS)

    # "plus" path: normalize the per-channel means across C (unbiased variance).
    # NOTE: C == 1 yields NaN here, matching torch.var(unbiased=True) behavior.
    m = jnp.mean(mean, axis=-1, keepdims=True)                # (N, 1)
    v = jnp.sum((mean - m) ** 2, axis=-1, keepdims=True) / (C - 1)
    means_hat = (mean - m) * jax.lax.rsqrt(v + _EPS)          # (N, C)

    scale = gamma32[None, :] * inv                            # (N, C)
    offset = beta32[None, :] + gamma32[None, :] * (
        alpha32[None, :] * means_hat - mean * inv
    )
    scale_offset = jnp.stack([scale, offset], axis=1)[..., None]   # (N, 2, C, 1)

    # -------------------- pass 2: one FMA per element ------------------------ #
    # TODO(synk): also tile C when C*TL*4 bytes alone would exceed ~8 MiB.
    out_p = pl.pallas_call(
        _apply_kernel,
        out_shape=jax.ShapeDtypeStruct((N, C, L_pad), out_dtype),
        grid=(N, nL),
        in_specs=[
            pl.BlockSpec((pl.Squeezed(), 2, C, 1), lambda n, l: (n, 0, 0, 0)),
            pl.BlockSpec((pl.Squeezed(), C, TL), lambda n, l: (n, 0, l)),
        ],
        out_specs=pl.BlockSpec((pl.Squeezed(), C, TL), lambda n, l: (n, 0, l)),
        compiler_params=pltpu.CompilerParams(
            dimension_semantics=("parallel", "parallel"),
            vmem_limit_bytes=_VMEM_LIMIT,
        ),
    )(scale_offset, x_p)

    return out_p[:, :, :L] if L_pad != L else out_p


def _reference(x, alpha, gamma, beta):
    # Pure-JAX reference mirroring the PyTorch forward.
    means = jnp.mean(x, axis=-1)                              # (N, C)
    m = jnp.mean(means, axis=-1, keepdims=True)               # (N, 1)
    v = jnp.var(means, axis=-1, keepdims=True, ddof=1)        # unbiased
    means = (means - m) / jnp.sqrt(v + _EPS)
    mu = jnp.mean(x, axis=-1, keepdims=True)
    var = jnp.var(x, axis=-1, keepdims=True)                  # biased
    h = (x - mu) / jnp.sqrt(var + _EPS)
    h = h + means[..., None] * alpha[None, :, None]
    return gamma[None, :, None] * h + beta[None, :, None]


if __name__ == "__main__":
    N, C, L = 2, 4, 16
    key = jax.random.PRNGKey(0)
    kx, ka, kg = jax.random.split(key, 3)

    x = jax.random.normal(kx, (N, C, L), dtype=jnp.float32)
    # deterministic init mirroring .normal_(1, 0.02); beta init zeros
    alpha = 1.0 + 0.02 * jax.random.normal(ka, (C,), dtype=jnp.float32)
    gamma = 1.0 + 0.02 * jax.random.normal(kg, (C,), dtype=jnp.float32)
    beta = jnp.zeros((C,), dtype=jnp.float32)

    out = instance_norm_1d_plus(x, alpha, gamma, beta)
    out = jax.block_until_ready(out)

    ref = _reference(x, alpha, gamma, beta)
    assert out.shape == (N, C, L)
    assert jnp.allclose(out, ref, atol=1e-4, rtol=1e-4), "mismatch vs reference"

    print("KERNEL_OK")
</pallas_src>

<mosaic_0001>
module attributes {stable_mosaic.version = 11 : i64} {
  func.func @_stats_kernel(%arg0: i32, %arg1: i32, %arg2: memref<1x4x128xf32, #tpu.memory_space<vmem>>, %arg3: memref<1x4x1xf32, #tpu.memory_space<vmem>>, %arg4: memref<1x4x1xf32, #tpu.memory_space<vmem>>) attributes {dimension_semantics = [#tpu.dimension_semantics<parallel>, #tpu.dimension_semantics<arbitrary>], iteration_bounds = array<i64: 2, 1>, scalar_prefetch = 0 : i64, scratch_operands = 0 : i64, tpu.core_type = #tpu.core_type<tc>, window_params = [{transform_indices = @transform_0, window_bounds = array<i64: 1, 4, 128>}, {transform_indices = @transform_1, window_bounds = array<i64: 1, 4, 1>}, {transform_indices = @transform_2, window_bounds = array<i64: 1, 4, 1>}]} {
    %c0_i32 = arith.constant 0 : i32
    %0 = arith.cmpi eq, %arg1, %c0_i32 : i32
    %1 = arith.extui %0 : i1 to i32
    %c0_i32_0 = arith.constant 0 : i32
    %2 = arith.cmpi ne, %1, %c0_i32_0 : i32
    scf.if %2 {
      %cst_16 = arith.constant 0.000000e+00 : f32
      %22 = vector.broadcast %cst_16 : f32 to vector<4x1xf32>
      %c0_17 = arith.constant 0 : index
      %c0_18 = arith.constant 0 : index
      %c0_19 = arith.constant 0 : index
      %23 = vector.load %arg3[%c0_17, %c0_18, %c0_19] : memref<1x4x1xf32, #tpu.memory_space<vmem>>, vector<1x4x1xf32>
      %24 = vector.shape_cast %23 : vector<1x4x1xf32> to vector<4x1xf32>
      %25 = vector.shape_cast %22 : vector<4x1xf32> to vector<1x4x1xf32>
      tpu.vector_store %arg3[%c0_17, %c0_18, %c0_19], %25 {strides = array<i32>} : memref<1x4x1xf32, #tpu.memory_space<vmem>>, vector<1x4x1xf32>,
      %cst_20 = arith.constant 0.000000e+00 : f32
      %26 = vector.broadcast %cst_20 : f32 to vector<4x1xf32>
      %c0_21 = arith.constant 0 : index
      %c0_22 = arith.constant 0 : index
      %c0_23 = arith.constant 0 : index
      %27 = vector.load %arg4[%c0_21, %c0_22, %c0_23] : memref<1x4x1xf32, #tpu.memory_space<vmem>>, vector<1x4x1xf32>
      %28 = vector.shape_cast %27 : vector<1x4x1xf32> to vector<4x1xf32>
      %29 = vector.shape_cast %26 : vector<4x1xf32> to vector<1x4x1xf32>
      tpu.vector_store %arg4[%c0_21, %c0_22, %c0_23], %29 {strides = array<i32>} : memref<1x4x1xf32, #tpu.memory_space<vmem>>, vector<1x4x1xf32>,
    } else {
    }
    %c0 = arith.constant 0 : index
    %c0_1 = arith.constant 0 : index
    %c0_2 = arith.constant 0 : index
    %3 = vector.load %arg2[%c0, %c0_1, %c0_2] : memref<1x4x128xf32, #tpu.memory_space<vmem>>, vector<1x4x128xf32>
    %4 = vector.shape_cast %3 : vector<1x4x128xf32> to vector<4x128xf32>
    %c0_3 = arith.constant 0 : index
    %c0_4 = arith.constant 0 : index
    %c0_5 = arith.constant 0 : index
    %5 = vector.load %arg3[%c0_3, %c0_4, %c0_5] : memref<1x4x1xf32, #tpu.memory_space<vmem>>, vector<1x4x1xf32>
    %6 = vector.shape_cast %5 : vector<1x4x1xf32> to vector<4x1xf32>
    %cst = arith.constant dense<0.000000e+00> : vector<4xf32>
    %7 = vector.multi_reduction <add>, %4, %cst [1] : vector<4x128xf32> to vector<4xf32>
    %8 = vector.shape_cast %7 : vector<4xf32> to vector<4x1xf32>
    %9 = arith.addf %6, %8 : vector<4x1xf32>
    %c0_6 = arith.constant 0 : index
    %c0_7 = arith.constant 0 : index
    %c0_8 = arith.constant 0 : index
    %10 = vector.load %arg3[%c0_6, %c0_7, %c0_8] : memref<1x4x1xf32, #tpu.memory_space<vmem>>, vector<1x4x1xf32>
    %11 = vector.shape_cast %10 : vector<1x4x1xf32> to vector<4x1xf32>
    %12 = vector.shape_cast %9 : vector<4x1xf32> to vector<1x4x1xf32>
    tpu.vector_store %arg3[%c0_6, %c0_7, %c0_8], %12 {strides = array<i32>} : memref<1x4x1xf32, #tpu.memory_space<vmem>>, vector<1x4x1xf32>,
    %c0_9 = arith.constant 0 : index
    %c0_10 = arith.constant 0 : index
    %c0_11 = arith.constant 0 : index
    %13 = vector.load %arg4[%c0_9, %c0_10, %c0_11] : memref<1x4x1xf32, #tpu.memory_space<vmem>>, vector<1x4x1xf32>
    %14 = vector.shape_cast %13 : vector<1x4x1xf32> to vector<4x1xf32>
    %15 = arith.mulf %4, %4 : vector<4x128xf32>
    %cst_12 = arith.constant dense<0.000000e+00> : vector<4xf32>
    %16 = vector.multi_reduction <add>, %15, %cst_12 [1] : vector<4x128xf32> to vector<4xf32>
    %17 = vector.shape_cast %16 : vector<4xf32> to vector<4x1xf32>
    %18 = arith.addf %14, %17 : vector<4x1xf32>
    %c0_13 = arith.constant 0 : index
    %c0_14 = arith.constant 0 : index
    %c0_15 = arith.constant 0 : index
    %19 = vector.load %arg4[%c0_13, %c0_14, %c0_15] : memref<1x4x1xf32, #tpu.memory_space<vmem>>, vector<1x4x1xf32>
    %20 = vector.shape_cast %19 : vector<1x4x1xf32> to vector<4x1xf32>
    %21 = vector.shape_cast %18 : vector<4x1xf32> to vector<1x4x1xf32>
    tpu.vector_store %arg4[%c0_13, %c0_14, %c0_15], %21 {strides = array<i32>} : memref<1x4x1xf32, #tpu.memory_space<vmem>>, vector<1x4x1xf32>,
    return
  }
  func.func @transform_0(%arg0: i32, %arg1: i32) -> (i32, i32, i32) {
    %c0_i32 = arith.constant 0 : i32
    %c0_i32_0 = arith.constant 0 : i32
    return %arg0, %c0_i32, %arg1 : i32, i32, i32
  }
  func.func @transform_1(%arg0: i32, %arg1: i32) -> (i32, i32, i32) {
    %c0_i32 = arith.constant 0 : i32
    %c0_i32_0 = arith.constant 0 : i32
    %c0_i32_1 = arith.constant 0 : i32
    return %arg0, %c0_i32, %c0_i32_0 : i32, i32, i32
  }
  func.func @transform_2(%arg0: i32, %arg1: i32) -> (i32, i32, i32) {
    %c0_i32 = arith.constant 0 : i32
    %c0_i32_0 = arith.constant 0 : i32
    %c0_i32_1 = arith.constant 0 : i32
    return %arg0, %c0_i32, %c0_i32_0 : i32, i32, i32
  }
}

</mosaic_0001>

<llo_original>
// kernel: tpu_custom_call.1
$region0: #{tpu_custom_call.1}
  #allocation0 [shape = 'u32[]', space=smem, size = 0x4, offset = 0x4, fixed_abs, tag = 'smem constant byte address 0x4 - core index']
  #allocation1 [shape = 'u32[144,128]{1,0:T(1,128)}', space=vmem, size = 0x12000, scoped, tag = 'internal scratch']
  %s0 = inlined_call_operand.hbm [shape: f32[2,4,128], index: 0, kind: input, shape index: {}]
  %s1 = inlined_call_operand.vmem [shape: f32[2,4,1], index: 1, kind: output, shape index: {0}]
  %s2 = inlined_call_operand.vmem [shape: f32[2,4,1], index: 2, kind: output, shape index: {1}]
  %3 = xla_tuple %s1, %s2
  %s4 = sld [smem:[#allocation0]]
  $region53: #{tpu_custom_call.1} parent=0
    _
  %s6 = ssub.s32 1, %s4
  %s7 = scalar_select 0, %s6, %s4
  $region1: #{tpu_custom_call.1} parent=0
    #allocation2 [shape = 'u8[4096]{0}', space=vmem, size = 0x1000, scoped, tag = 'input window, operand 0']
    #allocation3 [shape = 's32[2]{0}', space=sflag, size = 0x8, scoped, tag = 'scoped memory for tpu_custom_call.1']
    %8 = vsyncpa [#allocation3], 0
    %s9 = scalar_lea.sflag [#allocation3], 1
    %10 = vsyncpa %s9, 0
    loop: start=0, step=1, limit=4
    $region2: #{tpu_custom_call.1} parent=1 // loop_pre_header
      _
    $region3: #{tpu_custom_call.1} parent=1 // loop_header
      %s12 = sphi 0, %s16
      %p13 = scmp.ge.s32.totalorder %s12, 4
      %s19 = sphi 0, %s31
      %s20 = sphi 0, %s27
      %s21 = sphi 0, %s19
      %s22 = sphi 0, %s20
      %s23 = sphi 0, %s21
      %s24 = sphi 0, %s22
      %s36 = sphi 0, %s38
      %s39 = sphi 0, %s36
      %s40 = sphi 0, %s39
      %s56 = sphi 0, %s40
      %s62 = sphi 0, %s64
      %s65 = sphi 0, %s62
      %s66 = sphi 0, %s65
      %s82 = sphi 0, %s66
      %s88 = sphi 0, %s90
      %s91 = sphi 0, %s88
      %s92 = sphi 0, %s91
      %s108 = sphi 0, %s92
    $region4: #{tpu_custom_call.1} parent=1 // loop_header_branch
      %15 = sbr.rel (%p13) target = $region8
    $region5: #{tpu_custom_call.1} parent=1 // loop_body
      %s17 = ssub.s32 %s12, 1
      %s18 = ssub.s32 %s12, 2
      %s25 = sadd.s32 1, %s20
      %p26 = scmp.ge.s32.totalorder %s25, 1
      %s27 = scalar_select %p26, 0, %s25
      %s28 = sadd.s32 1, %s19
      %s29 = scalar_select %p26, %s28, %s19
      %p30 = scmp.ge.s32.totalorder %s29, 2
      %s31 = scalar_select %p30, 0, %s29
      %s32 = ssub.s32 %s19, %s31
      %s33 = ssub.s32 %s20, %s27
      %s34 = sor.u32 %s32, %s33
      %p35 = scmp.eq.s32.totalorder %s34, 0
      %s37 = sadd.s32 %s36, 1
      %s38 = scalar_select %p35, %s36, %s37
      %p41 = pneg %p35
      %p42 = scmp.eq.s32.totalorder %s12, 1
      %p43 = por %p41, %p42
      %p44 = scmp.ne.s32.totalorder %s36, %s39
      %p45 = scmp.eq.s32.totalorder %s12, 0
      %p46 = por %p44, %p45
      %p47 = scmp.ne.s32.totalorder %s36, %s39
      %p48 = scmp.eq.s32.totalorder %s17, 1
      %p49 = por %p47, %p48
      %p50 = scmp.ne.s32.totalorder %s39, %s40
      %p51 = scmp.eq.s32.totalorder %s17, 0
      %p52 = por %p50, %p51
      %p53 = scmp.ne.s32.totalorder %s39, %s40
      %p54 = scmp.eq.s32.totalorder %s18, 1
      %p55 = por %p53, %p54
      %p57 = scmp.ne.s32.totalorder %s40, %s56
      %p58 = scmp.eq.s32.totalorder %s18, 0
      %p59 = por %p57, %p58
      %s60 = ssub.s32 %s19, %s31
      %p61 = scmp.eq.s32.totalorder %s60, 0
      %s63 = sadd.s32 %s62, 1
      %s64 = scalar_select %p61, %s62, %s63
      %p67 = pneg %p61
      %p68 = scmp.eq.s32.totalorder %s12, 1
      %p69 = por %p67, %p68
      %p70 = scmp.ne.s32.totalorder %s62, %s65
      %p71 = scmp.eq.s32.totalorder %s12, 0
      %p72 = por %p70, %p71
      %p73 = scmp.ne.s32.totalorder %s62, %s65
      %p74 = scmp.eq.s32.totalorder %s17, 1
      %p75 = por %p73, %p74
      %p76 = scmp.ne.s32.totalorder %s65, %s66
      %p77 = scmp.eq.s32.totalorder %s17, 0
      %p78 = por %p76, %p77
      %p79 = scmp.ne.s32.totalorder %s65, %s66
      %p80 = scmp.eq.s32.totalorder %s18, 1
      %p81 = por %p79, %p80
      %p83 = scmp.ne.s32.totalorder %s66, %s82
      %p84 = scmp.eq.s32.totalorder %s18, 0
      %p85 = por %p83, %p84
      %s86 = ssub.s32 %s19, %s31
      %p87 = scmp.eq.s32.totalorder %s86, 0
      %s89 = sadd.s32 %s88, 1
      %s90 = scalar_select %p87, %s88, %s89
      %p93 = pneg %p87
      %p94 = scmp.eq.s32.totalorder %s12, 1
      %p95 = por %p93, %p94
      %p96 = scmp.ne.s32.totalorder %s88, %s91
      %p97 = scmp.eq.s32.totalorder %s12, 0
      %p98 = por %p96, %p97
      %p99 = scmp.ne.s32.totalorder %s88, %s91
      %p100 = scmp.eq.s32.totalorder %s17, 1
      %p101 = por %p99, %p100
      %p102 = scmp.ne.s32.totalorder %s91, %s92
      %p103 = scmp.eq.s32.totalorder %s17, 0
      %p104 = por %p102, %p103
      %p105 = scmp.ne.s32.totalorder %s91, %s92
      %p106 = scmp.eq.s32.totalorder %s18, 1
      %p107 = por %p105, %p106
      %p109 = scmp.ne.s32.totalorder %s92, %s108
      %p110 = scmp.eq.s32.totalorder %s18, 0
      %p111 = por %p109, %p110
      %p112 = scmp.le.s32.totalorder 1, %s12
      %p113 = scmp.lt.s32.totalorder %s12, 3
      %p114 = pnand %p112, %p113
      %p115 = pneg %p114
      // Predicated region
      $region9: #{tpu_custom_call.1} parent=5 // pred_check
        _
      $region10: #{tpu_custom_call.1} parent=5 // pred_check_branch
        %117 = sbr.rel (%p114) target = $region12
      $region11: #{tpu_custom_call.1} parent=5 // pred_region
        %s118 = ssub.s32 %s12, 1
      $region12: #{tpu_custom_call.1} parent=5 // pred_fallthru
        _
      %p119 = scmp.lt.s32.totalorder %s12, 2
      // Predicated region
      $region13: #{tpu_custom_call.1} parent=5 // pred_check
        %p120 = pneg %p119
      $region14: #{tpu_custom_call.1} parent=5 // pred_check_branch
        %122 = sbr.rel (%p120) target = $region16
      $region15: #{tpu_custom_call.1} parent=5 // pred_region
        // Predicated region
        $region17: #{tpu_custom_call.1} parent=15 // pred_check
          %p123 = pneg %p46
        $region18: #{tpu_custom_call.1} parent=15 // pred_check_branch
          %125 = sbr.rel (%p123) target = $region20
        $region19: #{tpu_custom_call.1} parent=15 // pred_region
          %s126 = sand.u32 %s36, 1
          %s127 = scalar_lea.sflag [#allocation3], %s126
          %s128 = sand.u32 %s36, 1
          %s129 = smul.addr %s128, 4
          %s130 = scalar_lea.vmem [#allocation2], %s129
          %s132 = ssub.s32 64, 64
          %133 = vsyncadd %s127, %s132
          %s134 = sadd.s32 %s20, %s19
          %s135 = smul.addr %s134, 64
          %s136 = scalar_lea.hbm %s0, %s135
          %s138 = sshll.u32 %s130, 4
          %s139 = int_to_ptr.vmem [resolvable:$true] %s138
          %141 = dma.hbm_to_vmem [thread:$0]  %s136, 64, %s139, %s127
        $region20: #{tpu_custom_call.1} parent=15 // pred_fallthru
          _
      $region16: #{tpu_custom_call.1} parent=5 // pred_fallthru
        _
      %p142 = scmp.le.s32.totalorder 1, %s12
      %p143 = scmp.lt.s32.totalorder %s12, 3
      %p144 = pnand %p142, %p143
      %p145 = pneg %p144
      // Predicated region
      $region21: #{tpu_custom_call.1} parent=5 // pred_check
        _
      $region22: #{tpu_custom_call.1} parent=5 // pred_check_branch
        %147 = sbr.rel (%p144) target = $region24
      $region23: #{tpu_custom_call.1} parent=5 // pred_region
        %s148 = ssub.s32 %s12, 1
        %s149 = sand.u32 %s39, 1
        %s150 = scalar_lea.sflag [#allocation3], %s149
        %s151 = sand.u32 %s39, 1
        %s152 = smul.addr %s151, 4
        %s153 = scalar_lea.vmem [#allocation2], %s152
        // Predicated region
        $region25: #{tpu_custom_call.1} parent=23 // pred_check
          %p154 = pneg %p52
        $region26: #{tpu_custom_call.1} parent=23 // pred_check_branch
          %156 = sbr.rel (%p154) target = $region28
        $region27: #{tpu_custom_call.1} parent=23 // pred_region
          %157 = dma.done %s150, 64
        $region28: #{tpu_custom_call.1} parent=23 // pred_fallthru
          _
        %s158 = sand.u32 %s39, 1
        %s159 = scalar_lea.sflag [#allocation3], %s158
        %s160 = sand.u32 %s39, 1
        %s161 = smul.addr %s160, 4
        %s162 = scalar_lea.vmem [#allocation2], %s161
        %p163 = pneg %p52
        %p164 = pneg %p49
        %p165 = pneg %p78
        %p166 = pneg %p75
        %p167 = scmp.lt.s32.totalorder %s21, 1
        %s168 = scalar_select %p167, %s21, 1
        %s169 = smul.addr %s168, 4
        %s170 = scalar_lea.vmem %s1, %s169
        %p171 = pneg %p104
        %p172 = pneg %p101
        %p173 = scmp.lt.s32.totalorder %s21, 1
        %s174 = scalar_select %p173, %s21, 1
        %s175 = smul.addr %s174, 4
        %s176 = scalar_lea.vmem %s2, %s175
        %p177 = scmp.lt.s32.totalorder %s21, 1
        %s178 = scalar_select %p177, %s21, 1
        %s179 = smul.addr %s178, 4
        %s180 = scalar_lea.vmem %s1, %s179
        %p181 = scmp.lt.s32.totalorder %s21, 1
        %s182 = scalar_select %p181, %s21, 1
        %s183 = smul.addr %s182, 4
        %s184 = scalar_lea.vmem %s2, %s183
        %p185 = scmp.eq.s32.totalorder %s22, 0
        // Predicated region
        $region29: #{tpu_custom_call.1} parent=23 // pred_check
          %p186 = pneg %p185
        $region30: #{tpu_custom_call.1} parent=23 // pred_check_branch
          %188 = sbr.rel (%p186) target = $region32
        $region31: #{tpu_custom_call.1} parent=23 // pred_region
          %vm189 = vcmask 3072
          %190 = vst.msk [vmem:[%s180] sm:$0xf] %vm189, 0.0
          %191 = vst.msk [vmem:[%s184] sm:$0xf] %vm189, 0.0
        $region32: #{tpu_custom_call.1} parent=23 // pred_fallthru
          _
        %v192 = vld [vmem:[%s153] sm:$0xf]
        %v193 = vld [vmem:[%s180] sm:$0xf]
        %vm194 = vcmask 1043456
        %v195 = vsel %vm194, %v192, 0.0
        %196 = vadd.xlane.f32.xlu0 %v195
        %v197 = vpop.xlane.xlu0 %196
        %v198 = vadd.f32 %v193, %v197
        %vm199 = vcmask 3072
        %200 = vst.msk [vmem:[%s180] sm:$0xf] %vm199, %v198
        %v201 = vld [vmem:[%s184] sm:$0xf]
        %v202 = vmul.f32 %v192, %v192
        %v203 = vsel %vm194, %v202, 0.0
        %204 = vadd.xlane.f32.xlu0 %v203
        %v205 = vpop.xlane.xlu0 %204
        %v206 = vadd.f32 %v201, %v205
        %207 = vst.msk [vmem:[%s184] sm:$0xf] %vm199, %v206
        %p208 = scmp.lt.s32.totalorder %s21, 1
        %s209 = scalar_select %p208, %s21, 1
        %s210 = smul.addr %s209, 4
        %s211 = scalar_lea.vmem %s1, %s210
        %p212 = scmp.lt.s32.totalorder %s21, 1
        %s213 = scalar_select %p212, %s21, 1
        %s214 = smul.addr %s213, 4
        %s215 = scalar_lea.vmem %s2, %s214
        // Predicated region
        $region33: #{tpu_custom_call.1} parent=23 // pred_check
          %p216 = pneg %p75
        $region34: #{tpu_custom_call.1} parent=23 // pred_check_branch
          %218 = sbr.rel (%p216) target = $region36
        $region35: #{tpu_custom_call.1} parent=23 // pred_region
          _
        $region36: #{tpu_custom_call.1} parent=23 // pred_fallthru
          _
        // Predicated region
        $region37: #{tpu_custom_call.1} parent=23 // pred_check
          %p219 = pneg %p101
        $region38: #{tpu_custom_call.1} parent=23 // pred_check_branch
          %221 = sbr.rel (%p219) target = $region40
        $region39: #{tpu_custom_call.1} parent=23 // pred_region
          _
        $region40: #{tpu_custom_call.1} parent=23 // pred_fallthru
          _
      $region24: #{tpu_custom_call.1} parent=5 // pred_fallthru
        _
      %p222 = scmp.le.s32.totalorder 2, %s12
      // Predicated region
      $region41: #{tpu_custom_call.1} parent=5 // pred_check
        %p223 = pneg %p222
      $region42: #{tpu_custom_call.1} parent=5 // pred_check_branch
        %225 = sbr.rel (%p223) target = $region44
      $region43: #{tpu_custom_call.1} parent=5 // pred_region
        %s226 = ssub.s32 %s12, 2
        // Predicated region
        $region45: #{tpu_custom_call.1} parent=43 // pred_check
          %p227 = pneg %p81
        $region46: #{tpu_custom_call.1} parent=43 // pred_check_branch
          %229 = sbr.rel (%p227) target = $region48
        $region47: #{tpu_custom_call.1} parent=43 // pred_region
          %p230 = scmp.lt.s32.totalorder %s23, 1
          %s231 = scalar_select %p230, %s23, 1
          %s232 = smul.addr %s231, 4
          %s233 = scalar_lea.vmem %s1, %s232
        $region48: #{tpu_custom_call.1} parent=43 // pred_fallthru
          _
        // Predicated region
        $region49: #{tpu_custom_call.1} parent=43 // pred_check
          %p234 = pneg %p107
        $region50: #{tpu_custom_call.1} parent=43 // pred_check_branch
          %236 = sbr.rel (%p234) target = $region52
        $region51: #{tpu_custom_call.1} parent=43 // pred_region
          %p237 = scmp.lt.s32.totalorder %s23, 1
          %s238 = scalar_select %p237, %s23, 1
          %s239 = smul.addr %s238, 4
          %s240 = scalar_lea.vmem %s2, %s239
        $region52: #{tpu_custom_call.1} parent=43 // pred_fallthru
          _
      $region44: #{tpu_custom_call.1} parent=5 // pred_fallthru
        _
    $region6: #{tpu_custom_call.1} parent=1 // loop_footer
      %s16 = sadd.s32 1, %s12
    $region7: #{tpu_custom_call.1} parent=1 // loop_footer_branch
      %11 = sbr.rel target = $region3
    $region8: #{tpu_custom_call.1} parent=1 // loop_exit
      _
    %241 = vsyncpa [#allocation3], 1
    %s242 = scalar_lea.sflag [#allocation3], 1
    %243 = vsyncpa %s242, 1

</llo_original>
